<compile_context>
chip_gen: v7x
topology: tpu7x:2x2x1
jax: 0.10.0
libtpu: 0.0.40
codegen_flags: <defaults>
</compile_context>

<pallas_src>
import math

import numpy as np
import jax
import jax.numpy as jnp
from jax.experimental import pallas as pl
from jax.experimental.pallas import tpu as pltpu


_LANE = 128
_SUBLANE = 8
# Conservative in-kernel VMEM budget: under the 32 MiB scoped default on
# v6e/v7x and leaves headroom on v5e.
_VMEM_BUDGET_BYTES = 24 * 1024 * 1024


def _round_up(v, m):
    return ((v + m - 1) // m) * m


def _num_tensorcores():
    """Best-effort TensorCore count per device (used only for grid splitting)."""
    try:
        dev = jax.devices()[0]
        if getattr(dev, "platform", "") != "tpu":
            return 1
        nc = getattr(dev, "num_cores", None)
        if isinstance(nc, int) and 0 < nc <= 8:
            return nc
        kind = str(getattr(dev, "device_kind", "")).lower()
        # v4 / v5p megacore and v7x expose 2 TensorCores per device.
        if any(tag in kind for tag in ("v4", "v5p", "v7", "7x")):
            return 2
    except Exception:
        pass
    return 1


def _pick_group(n_in, n_out, max_sel_bytes=1 << 20, max_group=64):
    """Rows folded per kernel row so the output last dim is lane-dense (>=128)."""
    if n_out >= _LANE:
        return 1

    def lane_fill(g):
        return (g * n_out) / (_LANE * pl.cdiv(g * n_out, _LANE))

    g = 1
    while g * n_out < _LANE:
        g *= 2
    # Fold more rows only if it materially improves lane fill and the
    # block-diagonal selection matrix stays tiny.
    while (g < max_group
           and lane_fill(2 * g) > lane_fill(g) + 0.05
           and (2 * g * n_in) * (2 * g * n_out) * 4 <= max_sel_bytes):
        g *= 2
    return g


def _vmem_estimate_bytes(bt, gin, gout, out_itemsize):
    """Double-buffered VMEM footprint of one pipeline stage."""
    in_tile = bt * _round_up(gin, _LANE) * 4
    out_tile = bt * _round_up(gout, _LANE) * out_itemsize
    sel = _round_up(gin, _SUBLANE) * _round_up(gout, _LANE) * 4
    consts = _SUBLANE * _round_up(gout, _LANE) * 4
    return 2 * (in_tile + out_tile + sel + consts)


def _mixed_embedding_kernel(x_ref, sel_ref, consts_ref, out_ref):
    # One MXU matmul does column gather + output ordering + omega scaling.
    z = jnp.dot(x_ref[...], sel_ref[...], preferred_element_type=jnp.float32)
    c = consts_ref[...]                    # row 0: bias (w*x0, +pi/2 for sin cols); row 1: is_embedded mask
    ang = z - c[0:1, :]
    # sin folded into cos via the -pi/2 bias shift -> a single transcendental + one select.
    out = jnp.where(c[1:2, :] != 0.0, jnp.cos(ang), ang)
    out_ref[...] = out.astype(out_ref.dtype)   # single full-tile, lane-dense store


def _build_selection(n_in, embedded_indices, periods, x0s):
    """Fused selection matrix, bias (with sin phase shift folded in) and embed mask."""
    all_emb = [int(i) for idx in embedded_indices for i in idx]
    if len(all_emb) != len(set(all_emb)):
        raise ValueError('Different embedding layers must be assigned to different feature indices.')
    emb_set = set(all_emb)
    nonembedded = [i for i in range(n_in) if i not in emb_set]
    n_non = len(nonembedded)
    n_emb = len(all_emb)
    n_out = n_non + 2 * n_emb

    sel = np.zeros((n_in, n_out), np.float32)
    bias = np.zeros((n_out,), np.float64)
    is_emb = np.zeros((n_out,), np.float32)

    for j, f in enumerate(nonembedded):
        sel[f, j] = 1.0                                   # pass-through column

    col = n_non
    for idx, p, v0 in zip(embedded_indices, periods, x0s):
        w = (2.0 * math.pi / np.asarray(p, np.float64)).astype(np.float32)
        v064 = np.asarray(v0, np.float64)
        k = len(idx)
        for t, f in enumerate(idx):
            sel[int(f), col + t] = w[t]                   # cos column (omega folded in)
            sel[int(f), col + k + t] = w[t]               # sin column
            bias[col + t] = float(w[t]) * v064[t]                       # cos: w*x - w*x0
            bias[col + k + t] = float(w[t]) * v064[t] + math.pi / 2.0   # sin(a) = cos(a - pi/2)
        is_emb[col:col + 2 * k] = 1.0
        col += 2 * k

    return sel, bias.astype(np.float32), is_emb, n_out


def mixed_embedding_forward(x, embedded_indices, periods, x0s, *,
                            batch_tile=8192, out_dtype=None, group=None):
    """Pallas implementation of MixedEmbedding.forward (periodic sub-embeddings).

    out_dtype=jnp.bfloat16 is the recommended fast path when downstream layers
    tolerate it: the kernel is HBM-bound and the output is wider than the
    input, so a bf16 store halves the dominant traffic term.
    """
    batch, n_in = x.shape
    out_dtype = x.dtype if out_dtype is None else jnp.dtype(out_dtype)

    sel_np, bias_np, is_emb_np, n_out = _build_selection(
        n_in, embedded_indices, periods, x0s)

    # ---- lane-density grouping: fold g batch rows into one kernel row -------
    g = _pick_group(n_in, n_out) if group is None else max(1, int(group))
    gin, gout = g * n_in, g * n_out
    if g == 1:
        sel_host = sel_np
        consts_host = np.stack([bias_np, is_emb_np], axis=0)
    else:
        sel_host = np.zeros((gin, gout), np.float32)
        consts_host = np.zeros((2, gout), np.float32)
        for t in range(g):
            sel_host[t * n_in:(t + 1) * n_in, t * n_out:(t + 1) * n_out] = sel_np
            consts_host[0, t * n_out:(t + 1) * n_out] = bias_np
            consts_host[1, t * n_out:(t + 1) * n_out] = is_emb_np
    sel = jnp.asarray(sel_host)
    consts = jnp.asarray(consts_host)

    # ---- choose the batch tile (in group-rows) -------------------------------
    n_groups = pl.cdiv(batch, g)
    itemsize = jnp.dtype(out_dtype).itemsize
    bt = max(_SUBLANE, _round_up(min(max(1, batch_tile // g), n_groups), _SUBLANE))
    # Cap by a conservative VMEM budget (safe for v7x's smaller VMEM too).
    # TODO(synk): if the (gin, gout) selection matrix alone outgrows the budget
    # (very wide embeddings) an n_out/K-tiled variant would be needed.
    while _vmem_estimate_bytes(bt, gin, gout, itemsize) > _VMEM_BUDGET_BYTES and bt > _SUBLANE:
        bt = max(_SUBLANE, _round_up(bt // 2, _SUBLANE))

    # Core-count-aware split: >=2 grid steps per TensorCore on 2-TC chips so
    # each core keeps DMA/compute overlap; on 1-TC chips only split for
    # pipeline depth when each step still has >= ~1024 rows.
    n_cores = _num_tensorcores()
    if n_cores >= 2:
        target_steps = min(2 * n_cores, max(1, batch // 512))
    else:
        target_steps = min(3, max(1, batch // 1024))
    if target_steps > 1:
        bt = min(bt, max(_SUBLANE, _round_up(pl.cdiv(n_groups, target_steps), _SUBLANE)))

    n_groups_padded = _round_up(n_groups, bt)
    batch_padded = n_groups_padded * g
    if batch_padded != batch:
        x = jnp.pad(x, ((0, batch_padded - batch), (0, 0)))
    xg = x.reshape(n_groups_padded, gin)          # contiguous (free) reshape
    grid = (n_groups_padded // bt,)

    est = _vmem_estimate_bytes(bt, gin, gout, itemsize)
    vmem_limit = int(min(max(est + est // 4 + (1 << 20), 8 << 20), 31 << 20))

    out = pl.pallas_call(
        _mixed_embedding_kernel,
        out_shape=jax.ShapeDtypeStruct((n_groups_padded, gout), out_dtype),
        grid_spec=pltpu.PrefetchScalarGridSpec(
            num_scalar_prefetch=0,
            grid=grid,
            in_specs=[
                pl.BlockSpec((bt, gin), lambda i: (i, 0)),
                pl.BlockSpec((gin, gout), lambda i: (0, 0)),
                pl.BlockSpec((2, gout), lambda i: (0, 0)),
            ],
            out_specs=pl.BlockSpec((bt, gout), lambda i: (i, 0)),
        ),
        compiler_params=pltpu.CompilerParams(
            dimension_semantics=("parallel",),
            vmem_limit_bytes=vmem_limit,
        ),
    )(xg, sel, consts)

    out = out.reshape(batch_padded, n_out)        # contiguous (free) reshape
    if batch_padded != batch:
        out = out[:batch]
    return out


def mixed_embedding_reference(x, embedded_indices, periods, x0s):
    """Pure-JAX reference mirroring the PyTorch forward."""
    n_in = x.shape[1]
    all_emb = set(int(i) for idx in embedded_indices for i in idx)
    nonembedded = [i for i in range(n_in) if i not in all_emb]
    pieces = [x[:, jnp.asarray(nonembedded, jnp.int32)]]
    for idx, p, v0 in zip(embedded_indices, periods, x0s):
        xi = x[:, jnp.asarray(idx, jnp.int32)]
        ang = 2.0 * math.pi / jnp.asarray(p, jnp.float32) * (xi - jnp.asarray(v0, jnp.float32))
        pieces.append(jnp.cos(ang))
        pieces.append(jnp.sin(ang))
    return jnp.concatenate(pieces, axis=1)


if __name__ == "__main__":
    key = jax.random.PRNGKey(0)

    n_features_in = 16
    # Two embedding layers assigned to disjoint feature indices.
    embedded_indices = [[1, 5, 9], [2, 7, 11, 13]]

    # Deterministic per-feature periodic-embedding parameters.
    periods = [
        [2.0 * math.pi, 1.0, 4.0],
        [2.0 * math.pi, 3.0, 0.5, 2.0],
    ]
    x0s = [
        [0.0, 0.25, -1.0],
        [0.5, 0.0, 0.1, -0.3],
    ]

    # Main check.
    batch = 16
    x = jax.random.normal(key, (batch, n_features_in), dtype=jnp.float32)
    out = jax.block_until_ready(mixed_embedding_forward(x, embedded_indices, periods, x0s))
    ref = mixed_embedding_reference(x, embedded_indices, periods, x0s)
    assert out.shape == ref.shape, (out.shape, ref.shape)
    assert jnp.allclose(out, ref, atol=5e-5, rtol=1e-5), float(jnp.max(jnp.abs(out - ref)))

    # Partial-tile check: batch not a multiple of the group/sublane size
    # (exercises the padding + reshape path; same padded shape -> cached compile).
    batch2 = 12
    x2 = jax.random.normal(jax.random.PRNGKey(1), (batch2, n_features_in), dtype=jnp.float32)
    out2 = jax.block_until_ready(mixed_embedding_forward(x2, embedded_indices, periods, x0s))
    ref2 = mixed_embedding_reference(x2, embedded_indices, periods, x0s)
    assert out2.shape == ref2.shape, (out2.shape, ref2.shape)
    assert jnp.allclose(out2, ref2, atol=5e-5, rtol=1e-5), float(jnp.max(jnp.abs(out2 - ref2)))

    # bf16 output fast path (halves output HBM traffic); loose tolerance for the cast.
    out3 = jax.block_until_ready(
        mixed_embedding_forward(x, embedded_indices, periods, x0s, out_dtype=jnp.bfloat16))
    assert out3.dtype == jnp.bfloat16
    assert jnp.allclose(out3.astype(jnp.float32), ref, atol=5e-2, rtol=5e-2)

    print("KERNEL_OK")
</pallas_src>

<mosaic_0001>
module attributes {stable_mosaic.version = 11 : i64} {
  func.func @_mixed_embedding_kernel(%arg0: i32, %arg1: memref<8x256xf32, #tpu.memory_space<vmem>>, %arg2: memref<256x368xf32, #tpu.memory_space<vmem>>, %arg3: memref<2x368xf32, #tpu.memory_space<vmem>>, %arg4: memref<8x368xf32, #tpu.memory_space<vmem>>) attributes {dimension_semantics = [#tpu.dimension_semantics<parallel>], iteration_bounds = array<i64: 1>, scalar_prefetch = 0 : i64, scratch_operands = 0 : i64, tpu.core_type = #tpu.core_type<tc>, window_params = [{transform_indices = @transform_0, window_bounds = array<i64: 8, 256>}, {pipeline_mode = #tpu.pipeline_mode<synchronous>, transform_indices = @transform_1, window_bounds = array<i64: 256, 368>}, {pipeline_mode = #tpu.pipeline_mode<synchronous>, transform_indices = @transform_2, window_bounds = array<i64: 2, 368>}, {transform_indices = @transform_3, window_bounds = array<i64: 8, 368>}]} {
    %c0 = arith.constant 0 : index
    %c0_0 = arith.constant 0 : index
    %0 = vector.load %arg1[%c0, %c0_0] : memref<8x256xf32, #tpu.memory_space<vmem>>, vector<8x256xf32>
    %c0_1 = arith.constant 0 : index
    %c0_2 = arith.constant 0 : index
    %1 = vector.load %arg2[%c0_1, %c0_2] : memref<256x368xf32, #tpu.memory_space<vmem>>, vector<256x368xf32>
    %cst = arith.constant dense<0.000000e+00> : vector<8x368xf32>
    %2 = tpu.matmul %0, %1, %cst {dimension_numbers = #tpu.dot_dimension_numbers<[1], [0], [0], [1], [0, 0, 1, 1], [], []>} : vector<8x256xf32>, vector<256x368xf32>, vector<8x368xf32> -> vector<8x368xf32>
    %c0_3 = arith.constant 0 : index
    %c0_4 = arith.constant 0 : index
    %3 = vector.load %arg3[%c0_3, %c0_4] : memref<2x368xf32, #tpu.memory_space<vmem>>, vector<2x368xf32>
    %4 = vector.extract_strided_slice %3 {offsets = [0, 0], sizes = [1, 368], strides = [1, 1]} : vector<2x368xf32> to vector<1x368xf32>
    %5 = vector.broadcast %4 : vector<1x368xf32> to vector<8x368xf32>
    %6 = arith.subf %2, %5 : vector<8x368xf32>
    %7 = vector.extract_strided_slice %3 {offsets = [1, 0], sizes = [1, 368], strides = [1, 1]} : vector<2x368xf32> to vector<1x368xf32>
    %cst_5 = arith.constant 0.000000e+00 : f32
    %8 = vector.broadcast %cst_5 : f32 to vector<1x368xf32>
    %9 = arith.cmpf one, %7, %8 : vector<1x368xf32>
    %10 = math.cos %6 : vector<8x368xf32>
    %11 = vector.shape_cast %9 : vector<1x368xi1> to vector<1x368xi1>
    %12 = vector.broadcast %11 : vector<1x368xi1> to vector<8x368xi1>
    %13 = arith.select %12, %10, %6 : vector<8x368xi1>, vector<8x368xf32>
    %c0_6 = arith.constant 0 : index
    %c0_7 = arith.constant 0 : index
    %14 = vector.load %arg4[%c0_6, %c0_7] : memref<8x368xf32, #tpu.memory_space<vmem>>, vector<8x368xf32>
    tpu.vector_store %arg4[%c0_6, %c0_7], %13 {strides = array<i32>} : memref<8x368xf32, #tpu.memory_space<vmem>>, vector<8x368xf32>,
    return
  }
  func.func @transform_0(%arg0: i32) -> (i32, i32) {
    %c0_i32 = arith.constant 0 : i32
    %c0_i32_0 = arith.constant 0 : i32
    return %arg0, %c0_i32 : i32, i32
  }
  func.func @transform_1(%arg0: i32) -> (i32, i32) {
    %c0_i32 = arith.constant 0 : i32
    %c0_i32_0 = arith.constant 0 : i32
    %c0_i32_1 = arith.constant 0 : i32
    return %c0_i32, %c0_i32_0 : i32, i32
  }
  func.func @transform_2(%arg0: i32) -> (i32, i32) {
    %c0_i32 = arith.constant 0 : i32
    %c0_i32_0 = arith.constant 0 : i32
    %c0_i32_1 = arith.constant 0 : i32
    return %c0_i32, %c0_i32_0 : i32, i32
  }
  func.func @transform_3(%arg0: i32) -> (i32, i32) {
    %c0_i32 = arith.constant 0 : i32
    %c0_i32_0 = arith.constant 0 : i32
    return %arg0, %c0_i32 : i32, i32
  }
}

</mosaic_0001>

<llo_original>
// kernel: tpu_custom_call.1
$region0: #{tpu_custom_call.1}
  #allocation0 [shape = 'u32[]', space=smem, size = 0x4, offset = 0x4, fixed_abs, tag = 'smem constant byte address 0x4 - core index']
  #allocation1 [shape = 'u32[144,128]{1,0:T(1,128)}', space=vmem, size = 0x12000, scoped, tag = 'internal scratch']
  %s0 = inlined_call_operand.vmem [shape: f32[8,256], index: 0, kind: input, shape index: {}]
  %s1 = inlined_call_operand.vmem [shape: f32[256,368], index: 1, kind: input, shape index: {}]
  %s2 = inlined_call_operand.vmem [shape: f32[2,368], index: 2, kind: input, shape index: {}]
  %s3 = inlined_call_operand.hbm [shape: f32[8,368], index: 3, kind: output, shape index: {}]
  %s4 = sld [smem:[#allocation0]]
  $region22: #{tpu_custom_call.1} parent=0
    _
  %s6 = ssub.s32 1, %s4
  %s7 = scalar_select 0, %s6, %s4
  $region1: #{tpu_custom_call.1} parent=0
    #allocation2 [shape = 'u8[12288]{0}', space=vmem, size = 0x3000, scoped, tag = 'output window, operand 0, single buffered']
    #allocation3 [shape = 's32[1]{0}', space=sflag, size = 0x4, scoped, tag = 'scoped memory for tpu_custom_call.1']
    %8 = vsyncpa [#allocation3], 0
    // Predicated region
    $region2: #{tpu_custom_call.1} parent=1 // pred_check
      _
    $region3: #{tpu_custom_call.1} parent=1 // pred_check_branch
      %10 = sbr.rel (0) target = $region5
    $region4: #{tpu_custom_call.1} parent=1 // pred_region
      _
    $region5: #{tpu_custom_call.1} parent=1 // pred_fallthru
      _
    // Predicated region
    $region6: #{tpu_custom_call.1} parent=1 // pred_check
      _
    $region7: #{tpu_custom_call.1} parent=1 // pred_check_branch
      %12 = sbr.rel (0) target = $region9
    $region8: #{tpu_custom_call.1} parent=1 // pred_region
      _
    $region9: #{tpu_custom_call.1} parent=1 // pred_fallthru
      _
    // Predicated region
    $region10: #{tpu_custom_call.1} parent=1 // pred_check
      _
    $region11: #{tpu_custom_call.1} parent=1 // pred_check_branch
      %14 = sbr.rel (0) target = $region13
    $region12: #{tpu_custom_call.1} parent=1 // pred_region
      _
    $region13: #{tpu_custom_call.1} parent=1 // pred_fallthru
      _
    %v15 = vld [vmem:[%s0] sm:$0xff]
    %v16 = vld [vmem:[%s0 + $0x8] sm:$0xff]
    %v17 = vld [vmem:[%s1] sm:$0xff]
    %v18 = vld [vmem:[%s1 + $0x8] sm:$0xff]
    %v19 = vld [vmem:[%s1 + $0x10] sm:$0xff]
    %v20 = vld [vmem:[%s1 + $0x18] sm:$0xff]
    %v21 = vld [vmem:[%s1 + $0x20] sm:$0xff]
    %v22 = vld [vmem:[%s1 + $0x28] sm:$0xff]
    %v23 = vld [vmem:[%s1 + $0x30] sm:$0xff]
    %v24 = vld [vmem:[%s1 + $0x38] sm:$0xff]
    %v25 = vld [vmem:[%s1 + $0x40] sm:$0xff]
    %v26 = vld [vmem:[%s1 + $0x48] sm:$0xff]
    %v27 = vld [vmem:[%s1 + $0x50] sm:$0xff]
    %v28 = vld [vmem:[%s1 + $0x58] sm:$0xff]
    %v29 = vld [vmem:[%s1 + $0x60] sm:$0xff]
    %v30 = vld [vmem:[%s1 + $0x68] sm:$0xff]
    %v31 = vld [vmem:[%s1 + $0x70] sm:$0xff]
    %v32 = vld [vmem:[%s1 + $0x78] sm:$0xff]
    %v33 = vld [vmem:[%s1 + $0x80] sm:$0xff]
    %v34 = vld [vmem:[%s1 + $0x88] sm:$0xff]
    %v35 = vld [vmem:[%s1 + $0x90] sm:$0xff]
    %v36 = vld [vmem:[%s1 + $0x98] sm:$0xff]
    %v37 = vld [vmem:[%s1 + $0xa0] sm:$0xff]
    %v38 = vld [vmem:[%s1 + $0xa8] sm:$0xff]
    %v39 = vld [vmem:[%s1 + $0xb0] sm:$0xff]
    %v40 = vld [vmem:[%s1 + $0xb8] sm:$0xff]
    %v41 = vld [vmem:[%s1 + $0xc0] sm:$0xff]
    %v42 = vld [vmem:[%s1 + $0xc8] sm:$0xff]
    %v43 = vld [vmem:[%s1 + $0xd0] sm:$0xff]
    %v44 = vld [vmem:[%s1 + $0xd8] sm:$0xff]
    %v45 = vld [vmem:[%s1 + $0xe0] sm:$0xff]
    %v46 = vld [vmem:[%s1 + $0xe8] sm:$0xff]
    %v47 = vld [vmem:[%s1 + $0xf0] sm:$0xff]
    %v48 = vld [vmem:[%s1 + $0xf8] sm:$0xff]
    %v49 = vld [vmem:[%s1 + $0x100] sm:$0xff]
    %v50 = vld [vmem:[%s1 + $0x108] sm:$0xff]
    %v51 = vld [vmem:[%s1 + $0x110] sm:$0xff]
    %v52 = vld [vmem:[%s1 + $0x118] sm:$0xff]
    %v53 = vld [vmem:[%s1 + $0x120] sm:$0xff]
    %v54 = vld [vmem:[%s1 + $0x128] sm:$0xff]
    %v55 = vld [vmem:[%s1 + $0x130] sm:$0xff]
    %v56 = vld [vmem:[%s1 + $0x138] sm:$0xff]
    %v57 = vld [vmem:[%s1 + $0x140] sm:$0xff]
    %v58 = vld [vmem:[%s1 + $0x148] sm:$0xff]
    %v59 = vld [vmem:[%s1 + $0x150] sm:$0xff]
    %v60 = vld [vmem:[%s1 + $0x158] sm:$0xff]
    %v61 = vld [vmem:[%s1 + $0x160] sm:$0xff]
    %v62 = vld [vmem:[%s1 + $0x168] sm:$0xff]
    %v63 = vld [vmem:[%s1 + $0x170] sm:$0xff]
    %v64 = vld [vmem:[%s1 + $0x178] sm:$0xff]
    %v65 = vld [vmem:[%s1 + $0x180] sm:$0xff]
    %v66 = vld [vmem:[%s1 + $0x188] sm:$0xff]
    %v67 = vld [vmem:[%s1 + $0x190] sm:$0xff]
    %v68 = vld [vmem:[%s1 + $0x198] sm:$0xff]
    %v69 = vld [vmem:[%s1 + $0x1a0] sm:$0xff]
    %v70 = vld [vmem:[%s1 + $0x1a8] sm:$0xff]
    %v71 = vld [vmem:[%s1 + $0x1b0] sm:$0xff]
    %v72 = vld [vmem:[%s1 + $0x1b8] sm:$0xff]
    %v73 = vld [vmem:[%s1 + $0x1c0] sm:$0xff]
    %v74 = vld [vmem:[%s1 + $0x1c8] sm:$0xff]
    %v75 = vld [vmem:[%s1 + $0x1d0] sm:$0xff]
    %v76 = vld [vmem:[%s1 + $0x1d8] sm:$0xff]
    %v77 = vld [vmem:[%s1 + $0x1e0] sm:$0xff]
    %v78 = vld [vmem:[%s1 + $0x1e8] sm:$0xff]
    %v79 = vld [vmem:[%s1 + $0x1f0] sm:$0xff]
    %v80 = vld [vmem:[%s1 + $0x1f8] sm:$0xff]
    %v81 = vld [vmem:[%s1 + $0x200] sm:$0xff]
    %v82 = vld [vmem:[%s1 + $0x208] sm:$0xff]
    %v83 = vld [vmem:[%s1 + $0x210] sm:$0xff]
    %v84 = vld [vmem:[%s1 + $0x218] sm:$0xff]
    %v85 = vld [vmem:[%s1 + $0x220] sm:$0xff]
    %v86 = vld [vmem:[%s1 + $0x228] sm:$0xff]
    %v87 = vld [vmem:[%s1 + $0x230] sm:$0xff]
    %v88 = vld [vmem:[%s1 + $0x238] sm:$0xff]
    %v89 = vld [vmem:[%s1 + $0x240] sm:$0xff]
    %v90 = vld [vmem:[%s1 + $0x248] sm:$0xff]
    %v91 = vld [vmem:[%s1 + $0x250] sm:$0xff]
    %v92 = vld [vmem:[%s1 + $0x258] sm:$0xff]
    %v93 = vld [vmem:[%s1 + $0x260] sm:$0xff]
    %v94 = vld [vmem:[%s1 + $0x268] sm:$0xff]
    %v95 = vld [vmem:[%s1 + $0x270] sm:$0xff]
    %v96 = vld [vmem:[%s1 + $0x278] sm:$0xff]
    %v97 = vld [vmem:[%s1 + $0x280] sm:$0xff]
    %v98 = vld [vmem:[%s1 + $0x288] sm:$0xff]
    %v99 = vld [vmem:[%s1 + $0x290] sm:$0xff]
    %v100 = vld [vmem:[%s1 + $0x298] sm:$0xff]
    %v101 = vld [vmem:[%s1 + $0x2a0] sm:$0xff]
    %v102 = vld [vmem:[%s1 + $0x2a8] sm:$0xff]
    %v103 = vld [vmem:[%s1 + $0x2b0] sm:$0xff]
    %v104 = vld [vmem:[%s1 + $0x2b8] sm:$0xff]
    %v105 = vld [vmem:[%s1 + $0x2c0] sm:$0xff]
    %v106 = vld [vmem:[%s1 + $0x2c8] sm:$0xff]
    %v107 = vld [vmem:[%s1 + $0x2d0] sm:$0xff]
    %v108 = vld [vmem:[%s1 + $0x2d8] sm:$0xff]
    %v109 = vld [vmem:[%s1 + $0x2e0] sm:$0xff]
    %v110 = vld [vmem:[%s1 + $0x2e8] sm:$0xff]
    %v111 = vld [vmem:[%s1 + $0x2f0] sm:$0xff]
    %v112 = vld [vmem:[%s1 + $0x2f8] sm:$0xff]
    %113 = vmatprep.subr.mxu0 %v18
    %114 = vmatpush1.msra.mxu0 %v17
    %115 = vmatprep.subr.mxu0 %v21
    %116 = vmatpush1.msra.mxu0 %v20
    %117 = vmatprep.subr.mxu0 %v24
    %118 = vmatpush1.msra.mxu0 %v23
    %119 = vmatprep.subr.mxu0 %v27
    %120 = vmatpush1.msra.mxu0 %v26
    %121 = vmatprep.subr.mxu0 %v30
    %122 = vmatpush1.msra.mxu0 %v29
    %123 = vmatprep.subr.mxu0 %v33
    %124 = vmatpush1.msra.mxu0 %v32
    %125 = vmatprep.subr.mxu0 %v36
    %126 = vmatpush1.msra.mxu0 %v35
    %127 = vmatprep.subr.mxu0 %v39
    %128 = vmatpush1.msra.mxu0 %v38
    %129 = vmatprep.subr.mxu0 %v42
    %130 = vmatpush1.msra.mxu0 %v41
    %131 = vmatprep.subr.mxu0 %v45
    %132 = vmatpush1.msra.mxu0 %v44
    %133 = vmatprep.subr.mxu0 %v48
    %134 = vmatpush1.msra.mxu0 %v47
    %135 = vmatprep.subr.mxu0 %v51
    %136 = vmatpush1.msra.mxu0 %v50
    %137 = vmatprep.subr.mxu0 %v54
    %138 = vmatpush1.msra.mxu0 %v53
    %139 = vmatprep.subr.mxu0 %v57
    %140 = vmatpush1.msra.mxu0 %v56
    %141 = vmatprep.subr.mxu0 %v60
    %142 = vmatpush1.msra.mxu0 %v59
    %143 = vmatprep.subr.mxu0 %v63
    %144 = vmatpush1.msra.mxu0 %v62
    %145 = vmatprep.subr.mxu0 %v66
    %146 = vmatpush1.msra.mxu0 %v65
    %147 = vmatprep.subr.mxu0 %v69
    %148 = vmatpush1.msra.mxu0 %v68
    %149 = vmatprep.subr.mxu0 %v72
    %150 = vmatpush1.msra.mxu0 %v71
    %151 = vmatprep.subr.mxu0 %v75
    %152 = vmatpush1.msra.mxu0 %v74
    %153 = vmatprep.subr.mxu0 %v78
    %154 = vmatpush1.msra.mxu0 %v77
    %155 = vmatprep.subr.mxu0 %v81
    %156 = vmatpush1.msra.mxu0 %v80
    %157 = vmatprep.subr.mxu0 %v84
    %158 = vmatpush1.msra.mxu0 %v83
    %159 = vmatprep.subr.mxu0 %v87
    %160 = vmatpush1.msra.mxu0 %v86
    %161 = vmatprep.subr.mxu0 %v90
    %162 = vmatpush1.msra.mxu0 %v89
    %163 = vmatprep.subr.mxu0 %v93
    %164 = vmatpush1.msra.mxu0 %v92
    %165 = vmatprep.subr.mxu0 %v96
    %166 = vmatpush1.msra.mxu0 %v95
    %167 = vmatprep.subr.mxu0 %v99
    %168 = vmatpush1.msra.mxu0 %v98
    %169 = vmatprep.subr.mxu0 %v102
    %170 = vmatpush1.msra.mxu0 %v101
    %171 = vmatprep.subr.mxu0 %v105
    %172 = vmatpush1.msra.mxu0 %v104
    %173 = vmatprep.subr.mxu0 %v108
    %174 = vmatpush1.msra.mxu0 %v107
    %175 = vmatprep.subr.mxu0 %v111
    %176 = vmatpush1.msra.mxu0 %v110
    %177 = vmatprep.mubr.f32.mxu0 %v16
    %178 = vmatmul.mubr.f32.gmra.mrb[0].mxu0 %v15
    %v179 = vpop.f32.mrb[0].mxu0
    %v180 = vadd.f32 0.0, %v179
    %v181 = vpop.f32.mrb[0].mxu0
    %v182 = vadd.f32 0.0, %v181
    %183 = vdwg.mxu0
    %184 = vmatprep.subr.mxu0 0.0
    %185 = vmatpush1.msra.mxu0 %v19
    %186 = vmatprep.subr.mxu0 0.0
    %187 = vmatpush1.msra.mxu0 %v22
    %188 = vmatprep.subr.mxu0 0.0
    %189 = vmatpush1.msra.mxu0 %v25
    %190 = vmatprep.subr.mxu0 0.0
    %191 = vmatpush1.msra.mxu0 %v28
    %192 = vmatprep.subr.mxu0 0.0
    %193 = vmatpush1.msra.mxu0 %v31
    %194 = vmatprep.subr.mxu0 0.0
    %195 = vmatpush1.msra.mxu0 %v34
    %196 = vmatprep.subr.mxu0 0.0
    %197 = vmatpush1.msra.mxu0 %v37
    %198 = vmatprep.subr.mxu0 0.0
    %199 = vmatpush1.msra.mxu0 %v40
    %200 = vmatprep.subr.mxu0 0.0
    %201 = vmatpush1.msra.mxu0 %v43
    %202 = vmatprep.subr.mxu0 0.0
    %203 = vmatpush1.msra.mxu0 %v46
    %204 = vmatprep.subr.mxu0 0.0
    %205 = vmatpush1.msra.mxu0 %v49
    %206 = vmatprep.subr.mxu0 0.0
    %207 = vmatpush1.msra.mxu0 %v52
    %208 = vmatprep.subr.mxu0 0.0
    %209 = vmatpush1.msra.mxu0 %v55
    %210 = vmatprep.subr.mxu0 0.0
    %211 = vmatpush1.msra.mxu0 %v58
    %212 = vmatprep.subr.mxu0 0.0
    %213 = vmatpush1.msra.mxu0 %v61
    %214 = vmatprep.subr.mxu0 0.0
    %215 = vmatpush1.msra.mxu0 %v64
    %216 = vmatprep.subr.mxu0 0.0
    %217 = vmatpush1.msra.mxu0 %v67
    %218 = vmatprep.subr.mxu0 0.0
    %219 = vmatpush1.msra.mxu0 %v70
    %220 = vmatprep.subr.mxu0 0.0
    %221 = vmatpush1.msra.mxu0 %v73
    %222 = vmatprep.subr.mxu0 0.0
    %223 = vmatpush1.msra.mxu0 %v76
    %224 = vmatprep.subr.mxu0 0.0
    %225 = vmatpush1.msra.mxu0 %v79
    %226 = vmatprep.subr.mxu0 0.0
    %227 = vmatpush1.msra.mxu0 %v82
    %228 = vmatprep.subr.mxu0 0.0
    %229 = vmatpush1.msra.mxu0 %v85
    %230 = vmatprep.subr.mxu0 0.0
    %231 = vmatpush1.msra.mxu0 %v88
    %232 = vmatprep.subr.mxu0 0.0
    %233 = vmatpush1.msra.mxu0 %v91
    %234 = vmatprep.subr.mxu0 0.0
    %235 = vmatpush1.msra.mxu0 %v94
    %236 = vmatprep.subr.mxu0 0.0
    %237 = vmatpush1.msra.mxu0 %v97
    %238 = vmatprep.subr.mxu0 0.0
    %239 = vmatpush1.msra.mxu0 %v100
    %240 = vmatprep.subr.mxu0 0.0
    %241 = vmatpush1.msra.mxu0 %v103
    %242 = vmatprep.subr.mxu0 0.0
    %243 = vmatpush1.msra.mxu0 %v106
    %244 = vmatprep.subr.mxu0 0.0
    %245 = vmatpush1.msra.mxu0 %v109
    %246 = vmatprep.subr.mxu0 0.0
    %247 = vmatpush1.msra.mxu0 %v112
    %248 = vmatprep.mubr.f32.mxu0 %v16
    %249 = vmatmul.mubr.f32.gmra.mrb[0].mxu0 %v15
    %v250 = vpop.f32.mrb[0].mxu0
    %v251 = vadd.f32 0.0, %v250
    %v252 = vpop.f32.mrb[0].mxu0
    %253 = vdwg.mxu0
    %v254 = vld [vmem:[%s2] sm:$0x3f]
    %v256 = vlaneseq
    %v257 = vshrl.u32 %v256, 7
    %v258 = vsub.s32 0, %v257
    %v259 = vrot.slane %v254, %v258
    %v260 = vlaneseq
    %v261 = vshrl.u32 %v260, 7
    %v262 = vsub.s32 2, %v261
    %v263 = vrot.slane %v254, %v262
    %v264 = vlaneseq
    %v265 = vshrl.u32 %v264, 7
    %v266 = vsub.s32 4, %v265
    %v267 = vrot.slane %v254, %v266
    %v271 = vlaneseq
    %v272 = vshrl.u32 %v271, 7
    %v273 = vsub.s32 0, %v272
    %v274 = vrot.slane %v259, %v273
    %v275 = vlaneseq
    %v276 = vshrl.u32 %v275, 7
    %v277 = vsub.s32 0, %v276
    %v278 = vrot.slane %v263, %v277
    %v279 = vlaneseq
    %v280 = vshrl.u32 %v279, 7
    %v281 = vsub.s32 0, %v280
    %v282 = vrot.slane %v267, %v281
    %v283 = vsub.f32 %v180, %v274
    %v284 = vsub.f32 %v182, %v278
    %v285 = vsub.f32 %v251, %v282
    %vm286 = vcmp.ne.f32.partialorder %v254, 0.0
    %v287 = vand.u32 2147483647, %v283
    %vm288 = vcmp.le.f32.partialorder %v287, 0.7853982
    %vm289 = vcmp.lt.s32.totalorder %v283, 0
    %v290 = vand.u32 %v283, 2139095040
    %v291 = vshrl.u32 %v290, 23
    %v292 = vsub.s32 %v291, 127
    %v293 = vand.u32 2147483647, %v283
    %v294 = vand.u32 %v293, 8388607
    %v295 = vor.u32 %v294, 8388608
    %v296 = vsub.s32 0, %v295
    %v297 = vadd.s32 %v292, 1
    %vm298 = vcmp.gt.s32.totalorder %v297, 0
    %v299 = vsel %vm298, %v297, 0
    %v300 = vshrl.u32 %v299, 5
    %v301 = vand.u32 %v299, 31
    %v302 = vsub.s32 32, %v301
    %v303 = vshrl.u32 683565275, %v302
    %v304 = vshll.u32 683565275, %v301
    %v305 = vshrl.u32 2475754826, %v302
    %v306 = vor.u32 %v304, %v305
    %v307 = vshll.u32 2475754826, %v301
    %v308 = vshrl.u32 2131351028, %v302
    %v309 = vor.u32 %v307, %v308
    %v310 = vshll.u32 2131351028, %v301
    %v311 = vshrl.u32 2102212464, %v302
    %v312 = vor.u32 %v310, %v311
    %v313 = vshll.u32 2102212464, %v301
    %v314 = vshrl.u32 920167782, %v302
    %v315 = vor.u32 %v313, %v314
    %v316 = vshll.u32 920167782, %v301
    %v317 = vshrl.u32 1326507024, %v302
    %v318 = vor.u32 %v316, %v317
    %vm319 = vcmp.lt.s32.totalorder %v300, 1
    %vm320 = vcmp.lt.s32.totalorder %v300, 2
    %vm321 = vcmp.lt.s32.totalorder %v300, 3
    %vm322 = vcmp.lt.s32.totalorder %v300, 4
    %v323 = vsel %vm319, %v303, %v306
    %v324 = vsel %vm322, %v312, 2102212464
    %v325 = vsel %vm321, %v309, %v324
    %v326 = vsel %vm320, %v323, %v325
    %v327 = vsel %vm319, %v306, %v309
    %v328 = vsel %vm322, %v315, 920167782
    %v329 = vsel %vm321, %v312, %v328
    %v330 = vsel %vm320, %v327, %v329
    %v331 = vsel %vm319, %v309, %v312
    %v332 = vsel %vm322, %v318, 1326507024
    %v333 = vsel %vm321, %v315, %v332
    %v334 = vsel %vm320, %v331, %v333
    %v335 = vshll.u32 %v295, 8
    %v336 = vmul.u32.u64.compose %v335, %v334
    %v337 = vextract.low.u32 %v336
    %v338 = vextract.high.u32 %v336
    %v339 = vmul.u32.u64.compose %v335, %v330
    %v340 = vextract.low.u32 %v339
    %v341 = vextract.high.u32 %v339
    %v342 = vmul.u32 %v335, %v326
    %v343 = vadd.s32 %v338, %v340
    %vm344 = vc.u32 %v338, %v340
    %v345 = vadd.s32 %v341, 1
    %v346 = vsel %vm344, %v345, %v341
    %v347 = vadd.s32 %v342, %v346
    %v348 = vadd.s32 %v347, 536870912
    %v349 = vshrl.u32 %v348, 30
    %v350 = vshll.u32 %v349, 30
    %v351 = vsub.s32 %v347, %v350
    %vm352 = vcmp.lt.s32.totalorder %v351, 0
    %v353 = vsub.s32 0, %v351
    %v354 = vsel %vm352, %v353, %v351
    %v355 = vclz %v354
    %v356 = vsub.s32 %v355, 2
    %vm357 = vcmp.gt.s32.totalorder 0, %v356
    %v358 = vsel %vm357, 0, %v356
    %v359 = vsub.s32 32, %v358
    %v360 = vshll.u32 %v351, %v358
    %v361 = vshrl.u32 %v343, %v359
    %v362 = vor.u32 %v360, %v361
    %v363 = vsub.s32 4294967266, %v358
    %v364 = vadd.s32 %v363, 127
    %v365 = vshll.u32 %v364, 23
    %v366 = vor.u32 4788187, %v365
    %v367 = vand.u32 2147483647, %v366
    %v369 = vcvt.s32.f32 %v362
    %v370 = vmul.f32 %v369, %v367
    %v371 = vxor.u32 %v370, 2147483648
    %v372 = vsel %vm289, %v371, %v370
    %v373 = vsub.s32 4, %v349
    %v374 = vsel %vm289, %v373, %v349
    %v375 = vsel %vm288, %v283, %v372
    %v376 = vsel %vm288, 0, %v374
    %v377 = vcosq.f32.pop %v375
    %v378 = vsinq.f32.pop %v375
    %vm379 = vweird.f32 %v283
    %v380 = vand.u32 %v376, 3
    %vm381 = vcmp.lt.s32.totalorder %v380, 2
    %vm382 = vcmp.eq.s32.totalorder %v380, 0
    %v383 = vxor.u32 %v378, 2147483648
    %v384 = vsel %vm382, %v377, %v383
    %vm385 = vcmp.eq.s32.totalorder %v380, 2
    %v386 = vxor.u32 %v377, 2147483648
    %v387 = vsel %vm385, %v386, %v378
    %v388 = vsel %vm381, %v384, %v387
    %v389 = vsel %vm379, nan, %v388
    %v390 = vand.u32 2147483647, %v284
    %vm391 = vcmp.le.f32.partialorder %v390, 0.7853982
    %vm392 = vcmp.lt.s32.totalorder %v284, 0
    %v393 = vand.u32 %v284, 2139095040
    %v394 = vshrl.u32 %v393, 23
    %v395 = vsub.s32 %v394, 127
    %v396 = vand.u32 2147483647, %v284
    %v397 = vand.u32 %v396, 8388607
    %v398 = vor.u32 %v397, 8388608
    %v399 = vsub.s32 0, %v398
    %v400 = vadd.s32 %v395, 1
    %vm401 = vcmp.gt.s32.totalorder %v400, 0
    %v402 = vsel %vm401, %v400, 0
    %v403 = vshrl.u32 %v402, 5
    %v404 = vand.u32 %v402, 31
    %v405 = vsub.s32 32, %v404
    %v406 = vshrl.u32 683565275, %v405
    %v407 = vshll.u32 683565275, %v404
    %v408 = vshrl.u32 2475754826, %v405
    %v409 = vor.u32 %v407, %v408
    %v410 = vshll.u32 2475754826, %v404
    %v411 = vshrl.u32 2131351028, %v405
    %v412 = vor.u32 %v410, %v411
    %v413 = vshll.u32 2131351028, %v404
    %v414 = vshrl.u32 2102212464, %v405
    %v415 = vor.u32 %v413, %v414
    %v416 = vshll.u32 2102212464, %v404
    %v417 = vshrl.u32 920167782, %v405
    %v418 = vor.u32 %v416, %v417
    %v419 = vshll.u32 920167782, %v404
    %v420 = vshrl.u32 1326507024, %v405
    %v421 = vor.u32 %v419, %v420
    %vm422 = vcmp.lt.s32.totalorder %v403, 1
    %vm423 = vcmp.lt.s32.totalorder %v403, 2
    %vm424 = vcmp.lt.s32.totalorder %v403, 3
    %vm425 = vcmp.lt.s32.totalorder %v403, 4
    %v426 = vsel %vm422, %v406, %v409
    %v427 = vsel %vm425, %v415, 2102212464
    %v428 = vsel %vm424, %v412, %v427
    %v429 = vsel %vm423, %v426, %v428
    %v430 = vsel %vm422, %v409, %v412
    %v431 = vsel %vm425, %v418, 920167782
    %v432 = vsel %vm424, %v415, %v431
    %v433 = vsel %vm423, %v430, %v432
    %v434 = vsel %vm422, %v412, %v415
    %v435 = vsel %vm425, %v421, 1326507024
    %v436 = vsel %vm424, %v418, %v435
    %v437 = vsel %vm423, %v434, %v436
    %v438 = vshll.u32 %v398, 8
    %v439 = vmul.u32.u64.compose %v438, %v437
    %v440 = vextract.low.u32 %v439
    %v441 = vextract.high.u32 %v439
    %v442 = vmul.u32.u64.compose %v438, %v433
    %v443 = vextract.low.u32 %v442
    %v444 = vextract.high.u32 %v442
    %v445 = vmul.u32 %v438, %v429
    %v446 = vadd.s32 %v441, %v443
    %vm447 = vc.u32 %v441, %v443
    %v448 = vadd.s32 %v444, 1
    %v449 = vsel %vm447, %v448, %v444
    %v450 = vadd.s32 %v445, %v449
    %v451 = vadd.s32 %v450, 536870912
    %v452 = vshrl.u32 %v451, 30
    %v453 = vshll.u32 %v452, 30
    %v454 = vsub.s32 %v450, %v453
    %vm455 = vcmp.lt.s32.totalorder %v454, 0
    %v456 = vsub.s32 0, %v454
    %v457 = vsel %vm455, %v456, %v454
    %v458 = vclz %v457
    %v459 = vsub.s32 %v458, 2
    %vm460 = vcmp.gt.s32.totalorder 0, %v459
    %v461 = vsel %vm460, 0, %v459
    %v462 = vsub.s32 32, %v461
    %v463 = vshll.u32 %v454, %v461
    %v464 = vshrl.u32 %v446, %v462
    %v465 = vor.u32 %v463, %v464
    %v466 = vsub.s32 4294967266, %v461
    %v467 = vadd.s32 %v466, 127
    %v468 = vshll.u32 %v467, 23
    %v469 = vor.u32 4788187, %v468
    %v470 = vand.u32 2147483647, %v469
    %v472 = vcvt.s32.f32 %v465
    %v473 = vmul.f32 %v472, %v470
    %v474 = vxor.u32 %v473, 2147483648
    %v475 = vsel %vm392, %v474, %v473
    %v476 = vsub.s32 4, %v452
    %v477 = vsel %vm392, %v476, %v452
    %v478 = vsel %vm391, %v284, %v475
    %v479 = vsel %vm391, 0, %v477
    %v480 = vcosq.f32.pop %v478
    %v481 = vsinq.f32.pop %v478
    %vm482 = vweird.f32 %v284
    %v483 = vand.u32 %v479, 3
    %vm484 = vcmp.lt.s32.totalorder %v483, 2
    %vm485 = vcmp.eq.s32.totalorder %v483, 0
    %v486 = vxor.u32 %v481, 2147483648
    %v487 = vsel %vm485, %v480, %v486
    %vm488 = vcmp.eq.s32.totalorder %v483, 2
    %v489 = vxor.u32 %v480, 2147483648
    %v490 = vsel %vm488, %v489, %v481
    %v491 = vsel %vm484, %v487, %v490
    %v492 = vsel %vm482, nan, %v491
    %v493 = vand.u32 2147483647, %v285
    %vm494 = vcmp.le.f32.partialorder %v493, 0.7853982
    %vm495 = vcmp.lt.s32.totalorder %v285, 0
    %v496 = vand.u32 %v285, 2139095040
    %v497 = vshrl.u32 %v496, 23
    %v498 = vsub.s32 %v497, 127
    %v499 = vand.u32 2147483647, %v285
    %v500 = vand.u32 %v499, 8388607
    %v501 = vor.u32 %v500, 8388608
    %v502 = vsub.s32 0, %v501
    %v503 = vadd.s32 %v498, 1
    %vm504 = vcmp.gt.s32.totalorder %v503, 0
    %v505 = vsel %vm504, %v503, 0
    %v506 = vshrl.u32 %v505, 5
    %v507 = vand.u32 %v505, 31
    %v508 = vsub.s32 32, %v507
    %v509 = vshrl.u32 683565275, %v508
    %v510 = vshll.u32 683565275, %v507
    %v511 = vshrl.u32 2475754826, %v508
    %v512 = vor.u32 %v510, %v511
    %v513 = vshll.u32 2475754826, %v507
    %v514 = vshrl.u32 2131351028, %v508
    %v515 = vor.u32 %v513, %v514
    %v516 = vshll.u32 2131351028, %v507
    %v517 = vshrl.u32 2102212464, %v508
    %v518 = vor.u32 %v516, %v517
    %v519 = vshll.u32 2102212464, %v507
    %v520 = vshrl.u32 920167782, %v508
    %v521 = vor.u32 %v519, %v520
    %v522 = vshll.u32 920167782, %v507
    %v523 = vshrl.u32 1326507024, %v508
    %v524 = vor.u32 %v522, %v523
    %vm525 = vcmp.lt.s32.totalorder %v506, 1
    %vm526 = vcmp.lt.s32.totalorder %v506, 2
    %vm527 = vcmp.lt.s32.totalorder %v506, 3
    %vm528 = vcmp.lt.s32.totalorder %v506, 4
    %v529 = vsel %vm525, %v509, %v512
    %v530 = vsel %vm528, %v518, 2102212464
    %v531 = vsel %vm527, %v515, %v530
    %v532 = vsel %vm526, %v529, %v531
    %v533 = vsel %vm525, %v512, %v515
    %v534 = vsel %vm528, %v521, 920167782
    %v535 = vsel %vm527, %v518, %v534
    %v536 = vsel %vm526, %v533, %v535
    %v537 = vsel %vm525, %v515, %v518
    %v538 = vsel %vm528, %v524, 1326507024
    %v539 = vsel %vm527, %v521, %v538
    %v540 = vsel %vm526, %v537, %v539
    %v541 = vshll.u32 %v501, 8
    %v542 = vmul.u32.u64.compose %v541, %v540
    %v543 = vextract.low.u32 %v542
    %v544 = vextract.high.u32 %v542
    %v545 = vmul.u32.u64.compose %v541, %v536
    %v546 = vextract.low.u32 %v545
    %v547 = vextract.high.u32 %v545
    %v548 = vmul.u32 %v541, %v532
    %v549 = vadd.s32 %v544, %v546
    %vm550 = vc.u32 %v544, %v546
    %v551 = vadd.s32 %v547, 1
    %v552 = vsel %vm550, %v551, %v547
    %v553 = vadd.s32 %v548, %v552
    %v554 = vadd.s32 %v553, 536870912
    %v555 = vshrl.u32 %v554, 30
    %v556 = vshll.u32 %v555, 30
    %v557 = vsub.s32 %v553, %v556
    %vm558 = vcmp.lt.s32.totalorder %v557, 0
    %v559 = vsub.s32 0, %v557
    %v560 = vsel %vm558, %v559, %v557
    %v561 = vclz %v560
    %v562 = vsub.s32 %v561, 2
    %vm563 = vcmp.gt.s32.totalorder 0, %v562
    %v564 = vsel %vm563, 0, %v562
    %v565 = vsub.s32 32, %v564
    %v566 = vshll.u32 %v557, %v564
    %v567 = vshrl.u32 %v549, %v565
    %v568 = vor.u32 %v566, %v567
    %v569 = vsub.s32 4294967266, %v564
    %v570 = vadd.s32 %v569, 127
    %v571 = vshll.u32 %v570, 23
    %v572 = vor.u32 4788187, %v571
    %v573 = vand.u32 2147483647, %v572
    %v575 = vcvt.s32.f32 %v568
    %v576 = vmul.f32 %v575, %v573
    %v577 = vxor.u32 %v576, 2147483648
    %v578 = vsel %vm495, %v577, %v576
    %v579 = vsub.s32 4, %v555
    %v580 = vsel %vm495, %v579, %v555
    %v581 = vsel %vm494, %v285, %v578
    %v582 = vsel %vm494, 0, %v580
    %v583 = vcosq.f32.pop %v581
    %v584 = vsinq.f32.pop %v581
    %vm585 = vweird.f32 %v285
    %v586 = vand.u32 %v582, 3
    %vm587 = vcmp.lt.s32.totalorder %v586, 2
    %vm588 = vcmp.eq.s32.totalorder %v586, 0
    %v589 = vxor.u32 %v584, 2147483648
    %v590 = vsel %vm588, %v583, %v589
    %vm591 = vcmp.eq.s32.totalorder %v586, 2
    %v592 = vxor.u32 %v583, 2147483648
    %v593 = vsel %vm591, %v592, %v584
    %v594 = vsel %vm587, %v590, %v593
    %v595 = vsel %vm585, nan, %v594
    %v596 = vsel %vm286, 1, 0
    %v597 = vlaneseq
    %v598 = vshrl.u32 %v597, 7
    %v599 = vsub.s32 1, %v598
    %v600 = vrot.slane %v596, %v599
    %v601 = vlaneseq
    %v602 = vshrl.u32 %v601, 7
    %v603 = vsub.s32 3, %v602
    %v604 = vrot.slane %v596, %v603
    %v605 = vlaneseq
    %v606 = vshrl.u32 %v605, 7
    %v607 = vsub.s32 5, %v606
    %v608 = vrot.slane %v596, %v607
    %v609 = vlaneseq
    %v610 = vshrl.u32 %v609, 7
    %v611 = vsub.s32 1, %v610
    %v612 = vrot.slane %v600, %v611
    %v613 = vlaneseq
    %v614 = vshrl.u32 %v613, 7
    %v615 = vsub.s32 1, %v614
    %v616 = vrot.slane %v604, %v615
    %v617 = vlaneseq
    %v618 = vshrl.u32 %v617, 7
    %v619 = vsub.s32 1, %v618
    %v620 = vrot.slane %v608, %v619
    %vm621 = vcmp.eq.s32.totalorder %v612, 1
    %vm622 = vcmp.eq.s32.totalorder %v616, 1
    %vm623 = vcmp.eq.s32.totalorder %v620, 1
    %v624 = vsel %vm621, %v389, %v283
    %v625 = vsel %vm622, %v492, %v284
    %v626 = vsel %vm623, %v595, %v285
    %627 = vst [vmem:[#allocation2] sm:$0xff] %v624
    %628 = vst [vmem:[#allocation2 + $0x8] sm:$0xff] %v625
    %vm629 = vcmask 916480
    %630 = vst.msk [vmem:[#allocation2 + $0x10] sm:$0xff] %vm629, %v626
    // Predicated region
    $region14: #{tpu_custom_call.1} parent=1 // pred_check
      _
    $region15: #{tpu_custom_call.1} parent=1 // pred_check_branch
      %632 = sbr.rel (0) target = $region17
    $region16: #{tpu_custom_call.1} parent=1 // pred_region
      %s634 = ssub.s32 384, 384
      %635 = vsyncadd [#allocation3], %s634
      %s637 = sshll.u32 [#allocation2], 4
      %s638 = int_to_ptr.vmem [resolvable:$true] %s637
      %640 = dma.vmem_to_hbm [thread:$0]  %s638, 384, %s3, [#allocation3]
    $region17: #{tpu_custom_call.1} parent=1 // pred_fallthru
      _
    // Predicated region
    $region18: #{tpu_custom_call.1} parent=1 // pred_check
      _
    $region19: #{tpu_custom_call.1} parent=1 // pred_check_branch
      %642 = sbr.rel (0) target = $region21
    $region20: #{tpu_custom_call.1} parent=1 // pred_region
      %643 = dma.done [#allocation3], 384
    $region21: #{tpu_custom_call.1} parent=1 // pred_fallthru
      _
    %644 = vsyncpa [#allocation3], 1

</llo_original>
